<compile_context>
chip_gen: v5e
topology: v5e:2x2
jax: 0.10.0
libtpu: 0.0.40
codegen_flags: <defaults>
</compile_context>

<pallas_src>
import math

import numpy as np
import jax
import jax.numpy as jnp
from jax.experimental import pallas as pl
from jax.experimental.pallas import tpu as pltpu


def _round_up(x, m):
    return ((x + m - 1) // m) * m


# --------------------------------------------------------------------------
# Init-time parameter prep (hoisted out of the per-forward path)
# --------------------------------------------------------------------------
def _build_banded_weights(w_hwio, w_in):
    """w_hwio: (k, k, Cin, Cout).  Returns (k, W_in*Cin, Wo*Cout) f32 with
    A[ki, (j+kj)*Cin + c, j*Cout + co] = w[ki, kj, c, co] (zero elsewhere), so
    that row-flattened conv is   y_row(i) = sum_ki x_row(i+ki) @ A[ki]."""
    k, _, cin, cout = w_hwio.shape
    wo = w_in - k + 1
    a = np.zeros((k, w_in * cin, wo * cout), np.float32)
    w_np = np.asarray(w_hwio, dtype=np.float32)
    for ki in range(k):
        for kj in range(k):
            for j in range(wo):
                a[ki, (j + kj) * cin:(j + kj + 1) * cin,
                  j * cout:(j + 1) * cout] = w_np[ki, kj]
    return jnp.asarray(a)


def prepare_params(params, *, input_h, input_w, freq_num, wind_size):
    """One-time prep: banded conv weights, tiled biases, padded regressor
    weights, fs vector and the sin table."""
    conv = []
    cur_h, cur_w = input_h, input_w
    for layer in params["conv_layers"]:
        k = layer["w"].shape[0]
        cout = layer["w"].shape[3]
        ho, wo = cur_h - k + 1, cur_w - k + 1
        conv.append(dict(
            a=_build_banded_weights(layer["w"], cur_w),          # (k, W*Ci, Wo*Co)
            b=jnp.tile(layer["b"], wo).reshape(1, wo * cout),    # (1, Wo*Co)
            k=k, ho=ho, wo=wo, cout=cout))
        cur_h, cur_w = ho, wo

    d, n = params["reg_w"].shape
    npad = _round_up(n, 128)                                     # lane-dense N
    reg_w = jnp.zeros((d, npad), jnp.float32).at[:, :n].set(params["reg_w"])
    reg_b = jnp.zeros((1, npad), jnp.float32).at[0, :n].set(params["reg_b"])

    fs = (1.0 / wind_size) * jnp.linspace(1.0, freq_num, freq_num).astype(jnp.float32)
    t = jnp.linspace(0.0, wind_size, input_w).astype(jnp.float32)
    sin_table = jnp.sin(2.0 * math.pi * fs[:, None] * t[None, :])  # (F, W)

    return dict(conv=conv, reg_w=reg_w, reg_b=reg_b,
                fs=fs.reshape(1, freq_num), sin_table=sin_table)


# --------------------------------------------------------------------------
# Call 1: all conv layers fused (direct conv via banded weights, no im2col)
# --------------------------------------------------------------------------
def conv_stack_pallas(x2d, conv_layers):
    """x2d: (B, H, W*C0) row-flattened NHWC.  Returns (B, Ho_L, Wo_L*C_L)."""
    B, H, WC0 = x2d.shape
    ho_last = conv_layers[-1]["ho"]
    wco_last = conv_layers[-1]["wo"] * conv_layers[-1]["cout"]

    def kernel(x_ref, *refs):
        o_ref = refs[-1]
        f = x_ref[0]                                             # (H, W*C0)
        for li, layer in enumerate(conv_layers):
            a_ref = refs[2 * li]
            b_ref = refs[2 * li + 1]
            ho, k = layer["ho"], layer["k"]
            acc = jnp.dot(f[0:ho, :], a_ref[0],
                          preferred_element_type=jnp.float32)
            for ki in range(1, k):
                acc = acc + jnp.dot(f[ki:ki + ho, :], a_ref[ki],
                                    preferred_element_type=jnp.float32)
            f = jnp.maximum(acc + b_ref[...], 0.0)               # bias + ReLU
        o_ref[0] = f                                             # (Ho_L, Wo_L*C_L)

    in_specs = [pl.BlockSpec((1, H, WC0), lambda b: (b, 0, 0))]
    args = [x2d]
    for layer in conv_layers:
        a, bias = layer["a"], layer["b"]
        in_specs.append(pl.BlockSpec(a.shape, lambda b: (0, 0, 0)))
        in_specs.append(pl.BlockSpec(bias.shape, lambda b: (0, 0)))
        args.extend([a, bias])

    return pl.pallas_call(
        kernel,
        out_shape=jax.ShapeDtypeStruct((B, ho_last, wco_last), jnp.float32),
        grid_spec=pltpu.PrefetchScalarGridSpec(
            num_scalar_prefetch=0,
            grid=(B,),
            in_specs=in_specs,
            out_specs=pl.BlockSpec((1, ho_last, wco_last), lambda b: (b, 0, 0)),
        ),
        compiler_params=pltpu.CompilerParams(
            dimension_semantics=("parallel",)),
    )(*args)


# --------------------------------------------------------------------------
# Call 2: regressor heads matmul + gumbel ST + frequency select + modulation,
#         single grid step over the whole batch, logits stay in VMEM.
# --------------------------------------------------------------------------
def heads_mod_pallas(feat_flat, reg_w, reg_b, gumbel2d, fs, sin_table,
                     feats0_t, *, head_num, freq_num):
    """feat_flat: (B, D); reg_w: (D, Npad); gumbel2d: (B, Nh*F);
    sin_table: (F, W); feats0_t: (B, W, H) -> mods (B, Nh, H), mod_f (B, Nh)."""
    B, D = feat_flat.shape
    Npad = reg_w.shape[1]
    F, W = sin_table.shape
    H = feats0_t.shape[2]
    Nh = head_num
    assert F == freq_num

    def kernel(x_ref, w_ref, b_ref, g_ref, fs_ref, st_ref, f0_ref,
               mods_ref, f_ref):
        # one single-step (B, D) x (D, Npad) MXU contraction; no K-tiling,
        # no scratch accumulator, result consumed in place.
        logits = jnp.dot(x_ref[...], w_ref[...],
                         preferred_element_type=jnp.float32) + b_ref[...]
        g = g_ref[...]
        col = jax.lax.broadcasted_iota(jnp.float32, (B, F), 1)   # hoisted
        sins = []
        f_cols = []
        for h in range(Nh):                                      # static unroll
            s = logits[:, h * F:(h + 1) * F] + g[:, h * F:(h + 1) * F]
            m = jnp.max(s, axis=-1, keepdims=True)
            # first argmax index (ties -> smallest), straight-through forward
            idx = jnp.min(jnp.where(s == m, col, float(F)), axis=-1,
                          keepdims=True)
            onehot = (col == idx).astype(jnp.float32)            # (B, F)
            f_cols.append(jnp.sum(onehot * fs_ref[...], axis=-1,
                                  keepdims=True))                # (B, 1)
            # sin(2*pi*f*t) == row-select of the precomputed table -> MXU
            sins.append(jnp.dot(onehot, st_ref[...],
                                preferred_element_type=jnp.float32))  # (B, W)
        f_ref[...] = jnp.concatenate(f_cols, axis=1)             # (B, Nh)
        inv_w = 1.0 / float(W)
        for b in range(B):                                       # static unroll
            sins_b = jnp.concatenate([sl[b:b + 1, :] for sl in sins], axis=0)
            # feats0 pre-transposed in the wrapper -> plain (Nh,W)x(W,H) matmul
            mods_ref[b] = jnp.dot(sins_b, f0_ref[b],
                                  preferred_element_type=jnp.float32) * inv_w

    mods, mod_f = pl.pallas_call(
        kernel,
        out_shape=(jax.ShapeDtypeStruct((B, Nh, H), jnp.float32),
                   jax.ShapeDtypeStruct((B, Nh), jnp.float32)),
        grid_spec=pltpu.PrefetchScalarGridSpec(
            num_scalar_prefetch=0,
            grid=(1,),
            in_specs=[
                pl.BlockSpec((B, D), lambda i: (0, 0)),
                pl.BlockSpec((D, Npad), lambda i: (0, 0)),
                pl.BlockSpec((1, Npad), lambda i: (0, 0)),
                pl.BlockSpec((B, Nh * F), lambda i: (0, 0)),
                pl.BlockSpec((1, F), lambda i: (0, 0)),
                pl.BlockSpec((F, W), lambda i: (0, 0)),
                pl.BlockSpec((B, W, H), lambda i: (0, 0, 0)),
            ],
            out_specs=[
                pl.BlockSpec((B, Nh, H), lambda i: (0, 0, 0)),
                pl.BlockSpec((B, Nh), lambda i: (0, 0)),
            ],
        ),
        compiler_params=pltpu.CompilerParams(
            dimension_semantics=("arbitrary",)),
    )(feat_flat, reg_w, reg_b, gumbel2d, fs, sin_table, feats0_t)
    return mods, mod_f


# --------------------------------------------------------------------------
# Full modnetEncoder forward (2 pallas_calls, 3 grid steps total)
# --------------------------------------------------------------------------
def modnet_encoder_forward(prep, inputs, gumbel, *, head_num, freq_num):
    """inputs: (B, C, H, W) NCHW as in the PyTorch module; gumbel: (B, Nh, F)."""
    B, C, H, W = inputs.shape
    feats0_t = jnp.transpose(inputs[:, 0, :, :], (0, 2, 1))      # (B, W, H)
    x2d = jnp.transpose(inputs, (0, 2, 3, 1)).reshape(B, H, W * C)
    feat = conv_stack_pallas(x2d, prep["conv"])                  # (B, Ho, Wo*Co)
    feat_flat = feat.reshape(B, -1)                              # NHWC flatten
    gumbel2d = gumbel.reshape(B, head_num * freq_num)
    mods, mod_f = heads_mod_pallas(
        feat_flat, prep["reg_w"], prep["reg_b"], gumbel2d,
        prep["fs"], prep["sin_table"], feats0_t,
        head_num=head_num, freq_num=freq_num)
    return mods.reshape(B, head_num * H), mod_f


# --------------------------------------------------------------------------
# Deterministic parameter init (shapes as in the PyTorch module)
# --------------------------------------------------------------------------
def init_params(key, in_channels, out_channels, kernel, freq_num, head_num,
                input_h, input_w):
    layers = []
    h, w = input_h, input_w
    for cin, cout in zip(in_channels, out_channels):
        key, k1, k2 = jax.random.split(key, 3)
        scale = 1.0 / math.sqrt(cin * kernel * kernel)
        layers.append(dict(
            w=jax.random.uniform(k1, (kernel, kernel, cin, cout), jnp.float32,
                                 -scale, scale),                 # HWIO
            b=jax.random.uniform(k2, (cout,), jnp.float32, -scale, scale)))
        h -= kernel - 1
        w -= kernel - 1
    cnn_out_dim = out_channels[-1] * h * w
    key, k3, k4 = jax.random.split(key, 3)
    scale = 1.0 / math.sqrt(cnn_out_dim)
    # all head_num regressors stacked head-major into one (D, Nh*F) matrix
    reg_w = jax.random.uniform(k3, (cnn_out_dim, head_num * freq_num),
                               jnp.float32, -scale, scale)
    reg_b = jax.random.uniform(k4, (head_num * freq_num,), jnp.float32,
                               -scale, scale)
    return dict(conv_layers=layers, reg_w=reg_w, reg_b=reg_b), cnn_out_dim


# --------------------------------------------------------------------------
# Pure-JAX reference (for correctness check)
# --------------------------------------------------------------------------
def _forward_ref(params, inputs, gumbel, wind_size, freq_num):
    B, C, H, W = inputs.shape
    feats0 = inputs[:, 0, :, :]
    x = jnp.transpose(inputs, (0, 2, 3, 1))
    for layer in params["conv_layers"]:
        x = jax.lax.conv_general_dilated(
            x, layer["w"], window_strides=(1, 1), padding="VALID",
            dimension_numbers=("NHWC", "HWIO", "NHWC"),
            precision=jax.lax.Precision.HIGHEST)
        x = jnp.maximum(x + layer["b"], 0.0)
    feat_flat = x.reshape(B, -1)
    logits = jnp.dot(feat_flat, params["reg_w"],
                     precision=jax.lax.Precision.HIGHEST) + params["reg_b"]
    Nh = gumbel.shape[1]
    logits = logits.reshape(B, Nh, freq_num)
    idx = jnp.argmax(logits + gumbel, axis=-1)                   # (B, Nh)
    fs = (1.0 / wind_size) * jnp.linspace(1.0, freq_num, freq_num).astype(jnp.float32)
    f = fs[idx]                                                  # (B, Nh)
    t = jnp.linspace(0.0, wind_size, W).astype(jnp.float32)
    sins = jnp.sin(2.0 * math.pi * f[:, :, None] * t[None, None, :])
    mods = jnp.einsum("bkw,bhw->bkh", sins, feats0,
                      precision=jax.lax.Precision.HIGHEST) / W
    return mods.reshape(B, Nh * H), f


if __name__ == "__main__":
    # Small shapes consistent with the module's forward.
    B = 2
    input_h = input_w = 16
    in_channels = (2, 4)
    out_channels = (4, 8)
    kernel_size = 3
    freq_num = 16
    wind_size = 1.0
    head_num = 4

    key = jax.random.PRNGKey(0)
    key, kx, kg, kp = jax.random.split(key, 4)
    inputs = jax.random.normal(kx, (B, in_channels[0], input_h, input_w),
                               jnp.float32)
    # sample_gumbel equivalent, deterministic via jax.random
    u = jax.random.uniform(kg, (B, head_num, freq_num), jnp.float32)
    gumbel = -jnp.log(-jnp.log(u + 1e-20) + 1e-20)

    params, cnn_out_dim = init_params(kp, in_channels, out_channels,
                                      kernel_size, freq_num, head_num,
                                      input_h, input_w)
    prep = prepare_params(params, input_h=input_h, input_w=input_w,
                          freq_num=freq_num, wind_size=wind_size)

    mods, mod_f = modnet_encoder_forward(prep, inputs, gumbel,
                                         head_num=head_num, freq_num=freq_num)
    mods = jax.block_until_ready(mods)
    mod_f = jax.block_until_ready(mod_f)

    ref_mods, ref_f = _forward_ref(params, inputs, gumbel, wind_size, freq_num)
    assert mods.shape == (B, head_num * input_h), mods.shape
    assert mod_f.shape == (B, head_num), mod_f.shape
    assert jnp.allclose(mod_f, ref_f, atol=1e-5, rtol=1e-5), "mod_f mismatch"
    assert jnp.allclose(mods, ref_mods, atol=1e-4, rtol=1e-4), "mods mismatch"

    print("KERNEL_OK")
</pallas_src>

<mosaic_0001>
module attributes {stable_mosaic.version = 11 : i64} {
  func.func @kernel(%arg0: i32, %arg1: memref<1x16x32xf32, #tpu.memory_space<vmem>>, %arg2: memref<3x32x56xf32, #tpu.memory_space<vmem>>, %arg3: memref<1x56xf32, #tpu.memory_space<vmem>>, %arg4: memref<3x56x96xf32, #tpu.memory_space<vmem>>, %arg5: memref<1x96xf32, #tpu.memory_space<vmem>>, %arg6: memref<1x12x96xf32, #tpu.memory_space<vmem>>) attributes {dimension_semantics = [#tpu.dimension_semantics<parallel>], iteration_bounds = array<i64: 2>, scalar_prefetch = 0 : i64, scratch_operands = 0 : i64, tpu.core_type = #tpu.core_type<tc>, window_params = [{transform_indices = @transform_0, window_bounds = array<i64: 1, 16, 32>}, {pipeline_mode = #tpu.pipeline_mode<synchronous>, transform_indices = @transform_1, window_bounds = array<i64: 3, 32, 56>}, {pipeline_mode = #tpu.pipeline_mode<synchronous>, transform_indices = @transform_2, window_bounds = array<i64: 1, 56>}, {pipeline_mode = #tpu.pipeline_mode<synchronous>, transform_indices = @transform_3, window_bounds = array<i64: 3, 56, 96>}, {pipeline_mode = #tpu.pipeline_mode<synchronous>, transform_indices = @transform_4, window_bounds = array<i64: 1, 96>}, {transform_indices = @transform_5, window_bounds = array<i64: 1, 12, 96>}]} {
    %c0 = arith.constant 0 : index
    %c0_0 = arith.constant 0 : index
    %c0_1 = arith.constant 0 : index
    %0 = vector.load %arg1[%c0, %c0_0, %c0_1] : memref<1x16x32xf32, #tpu.memory_space<vmem>>, vector<1x16x32xf32>
    %1 = vector.shape_cast %0 : vector<1x16x32xf32> to vector<16x32xf32>
    %2 = vector.extract_strided_slice %1 {offsets = [0, 0], sizes = [14, 32], strides = [1, 1]} : vector<16x32xf32> to vector<14x32xf32>
    %c0_2 = arith.constant 0 : index
    %c0_3 = arith.constant 0 : index
    %c0_4 = arith.constant 0 : index
    %3 = vector.load %arg2[%c0_2, %c0_3, %c0_4] : memref<3x32x56xf32, #tpu.memory_space<vmem>>, vector<1x32x56xf32>
    %4 = vector.shape_cast %3 : vector<1x32x56xf32> to vector<32x56xf32>
    %cst = arith.constant dense<0.000000e+00> : vector<14x56xf32>
    %5 = tpu.matmul %2, %4, %cst {dimension_numbers = #tpu.dot_dimension_numbers<[1], [0], [0], [1], [0, 0, 1, 1], [], []>} : vector<14x32xf32>, vector<32x56xf32>, vector<14x56xf32> -> vector<14x56xf32>
    %6 = vector.extract_strided_slice %1 {offsets = [1, 0], sizes = [14, 32], strides = [1, 1]} : vector<16x32xf32> to vector<14x32xf32>
    %c1 = arith.constant 1 : index
    %c0_5 = arith.constant 0 : index
    %c0_6 = arith.constant 0 : index
    %7 = vector.load %arg2[%c1, %c0_5, %c0_6] : memref<3x32x56xf32, #tpu.memory_space<vmem>>, vector<1x32x56xf32>
    %8 = vector.shape_cast %7 : vector<1x32x56xf32> to vector<32x56xf32>
    %cst_7 = arith.constant dense<0.000000e+00> : vector<14x56xf32>
    %9 = tpu.matmul %6, %8, %cst_7 {dimension_numbers = #tpu.dot_dimension_numbers<[1], [0], [0], [1], [0, 0, 1, 1], [], []>} : vector<14x32xf32>, vector<32x56xf32>, vector<14x56xf32> -> vector<14x56xf32>
    %10 = arith.addf %5, %9 : vector<14x56xf32>
    %11 = vector.extract_strided_slice %1 {offsets = [2, 0], sizes = [14, 32], strides = [1, 1]} : vector<16x32xf32> to vector<14x32xf32>
    %c2 = arith.constant 2 : index
    %c0_8 = arith.constant 0 : index
    %c0_9 = arith.constant 0 : index
    %12 = vector.load %arg2[%c2, %c0_8, %c0_9] : memref<3x32x56xf32, #tpu.memory_space<vmem>>, vector<1x32x56xf32>
    %13 = vector.shape_cast %12 : vector<1x32x56xf32> to vector<32x56xf32>
    %cst_10 = arith.constant dense<0.000000e+00> : vector<14x56xf32>
    %14 = tpu.matmul %11, %13, %cst_10 {dimension_numbers = #tpu.dot_dimension_numbers<[1], [0], [0], [1], [0, 0, 1, 1], [], []>} : vector<14x32xf32>, vector<32x56xf32>, vector<14x56xf32> -> vector<14x56xf32>
    %15 = arith.addf %10, %14 : vector<14x56xf32>
    %c0_11 = arith.constant 0 : index
    %c0_12 = arith.constant 0 : index
    %16 = vector.load %arg3[%c0_11, %c0_12] : memref<1x56xf32, #tpu.memory_space<vmem>>, vector<1x56xf32>
    %17 = vector.broadcast %16 : vector<1x56xf32> to vector<14x56xf32>
    %18 = arith.addf %15, %17 : vector<14x56xf32>
    %cst_13 = arith.constant 0.000000e+00 : f32
    %19 = vector.broadcast %cst_13 : f32 to vector<14x56xf32>
    %20 = arith.maximumf %18, %19 : vector<14x56xf32>
    %21 = vector.extract_strided_slice %20 {offsets = [0, 0], sizes = [12, 56], strides = [1, 1]} : vector<14x56xf32> to vector<12x56xf32>
    %c0_14 = arith.constant 0 : index
    %c0_15 = arith.constant 0 : index
    %c0_16 = arith.constant 0 : index
    %22 = vector.load %arg4[%c0_14, %c0_15, %c0_16] : memref<3x56x96xf32, #tpu.memory_space<vmem>>, vector<1x56x96xf32>
    %23 = vector.shape_cast %22 : vector<1x56x96xf32> to vector<56x96xf32>
    %cst_17 = arith.constant dense<0.000000e+00> : vector<12x96xf32>
    %24 = tpu.matmul %21, %23, %cst_17 {dimension_numbers = #tpu.dot_dimension_numbers<[1], [0], [0], [1], [0, 0, 1, 1], [], []>} : vector<12x56xf32>, vector<56x96xf32>, vector<12x96xf32> -> vector<12x96xf32>
    %25 = vector.extract_strided_slice %20 {offsets = [1, 0], sizes = [12, 56], strides = [1, 1]} : vector<14x56xf32> to vector<12x56xf32>
    %c1_18 = arith.constant 1 : index
    %c0_19 = arith.constant 0 : index
    %c0_20 = arith.constant 0 : index
    %26 = vector.load %arg4[%c1_18, %c0_19, %c0_20] : memref<3x56x96xf32, #tpu.memory_space<vmem>>, vector<1x56x96xf32>
    %27 = vector.shape_cast %26 : vector<1x56x96xf32> to vector<56x96xf32>
    %cst_21 = arith.constant dense<0.000000e+00> : vector<12x96xf32>
    %28 = tpu.matmul %25, %27, %cst_21 {dimension_numbers = #tpu.dot_dimension_numbers<[1], [0], [0], [1], [0, 0, 1, 1], [], []>} : vector<12x56xf32>, vector<56x96xf32>, vector<12x96xf32> -> vector<12x96xf32>
    %29 = arith.addf %24, %28 : vector<12x96xf32>
    %30 = vector.extract_strided_slice %20 {offsets = [2, 0], sizes = [12, 56], strides = [1, 1]} : vector<14x56xf32> to vector<12x56xf32>
    %c2_22 = arith.constant 2 : index
    %c0_23 = arith.constant 0 : index
    %c0_24 = arith.constant 0 : index
    %31 = vector.load %arg4[%c2_22, %c0_23, %c0_24] : memref<3x56x96xf32, #tpu.memory_space<vmem>>, vector<1x56x96xf32>
    %32 = vector.shape_cast %31 : vector<1x56x96xf32> to vector<56x96xf32>
    %cst_25 = arith.constant dense<0.000000e+00> : vector<12x96xf32>
    %33 = tpu.matmul %30, %32, %cst_25 {dimension_numbers = #tpu.dot_dimension_numbers<[1], [0], [0], [1], [0, 0, 1, 1], [], []>} : vector<12x56xf32>, vector<56x96xf32>, vector<12x96xf32> -> vector<12x96xf32>
    %34 = arith.addf %29, %33 : vector<12x96xf32>
    %c0_26 = arith.constant 0 : index
    %c0_27 = arith.constant 0 : index
    %35 = vector.load %arg5[%c0_26, %c0_27] : memref<1x96xf32, #tpu.memory_space<vmem>>, vector<1x96xf32>
    %36 = vector.broadcast %35 : vector<1x96xf32> to vector<12x96xf32>
    %37 = arith.addf %34, %36 : vector<12x96xf32>
    %cst_28 = arith.constant 0.000000e+00 : f32
    %38 = vector.broadcast %cst_28 : f32 to vector<12x96xf32>
    %39 = arith.maximumf %37, %38 : vector<12x96xf32>
    %c0_29 = arith.constant 0 : index
    %c0_30 = arith.constant 0 : index
    %c0_31 = arith.constant 0 : index
    %40 = vector.load %arg6[%c0_29, %c0_30, %c0_31] : memref<1x12x96xf32, #tpu.memory_space<vmem>>, vector<1x12x96xf32>
    %41 = vector.shape_cast %40 : vector<1x12x96xf32> to vector<12x96xf32>
    %42 = vector.shape_cast %39 : vector<12x96xf32> to vector<1x12x96xf32>
    tpu.vector_store %arg6[%c0_29, %c0_30, %c0_31], %42 {strides = array<i32>} : memref<1x12x96xf32, #tpu.memory_space<vmem>>, vector<1x12x96xf32>,
    return
  }
  func.func @transform_0(%arg0: i32) -> (i32, i32, i32) {
    %c0_i32 = arith.constant 0 : i32
    %c0_i32_0 = arith.constant 0 : i32
    %c0_i32_1 = arith.constant 0 : i32
    return %arg0, %c0_i32, %c0_i32_0 : i32, i32, i32
  }
  func.func @transform_1(%arg0: i32) -> (i32, i32, i32) {
    %c0_i32 = arith.constant 0 : i32
    %c0_i32_0 = arith.constant 0 : i32
    %c0_i32_1 = arith.constant 0 : i32
    %c0_i32_2 = arith.constant 0 : i32
    return %c0_i32, %c0_i32_0, %c0_i32_1 : i32, i32, i32
  }
  func.func @transform_2(%arg0: i32) -> (i32, i32) {
    %c0_i32 = arith.constant 0 : i32
    %c0_i32_0 = arith.constant 0 : i32
    %c0_i32_1 = arith.constant 0 : i32
    return %c0_i32, %c0_i32_0 : i32, i32
  }
  func.func @transform_3(%arg0: i32) -> (i32, i32, i32) {
    %c0_i32 = arith.constant 0 : i32
    %c0_i32_0 = arith.constant 0 : i32
    %c0_i32_1 = arith.constant 0 : i32
    %c0_i32_2 = arith.constant 0 : i32
    return %c0_i32, %c0_i32_0, %c0_i32_1 : i32, i32, i32
  }
  func.func @transform_4(%arg0: i32) -> (i32, i32) {
    %c0_i32 = arith.constant 0 : i32
    %c0_i32_0 = arith.constant 0 : i32
    %c0_i32_1 = arith.constant 0 : i32
    return %c0_i32, %c0_i32_0 : i32, i32
  }
  func.func @transform_5(%arg0: i32) -> (i32, i32, i32) {
    %c0_i32 = arith.constant 0 : i32
    %c0_i32_0 = arith.constant 0 : i32
    %c0_i32_1 = arith.constant 0 : i32
    return %arg0, %c0_i32, %c0_i32_0 : i32, i32, i32
  }
}

</mosaic_0001>

<llo_original>
// kernel: tpu_custom_call.1
$region0: #{tpu_custom_call.1}
  #allocation0 [shape = 'u32[]', space=smem, size = 0x4, offset = 0x4, fixed_abs, tag = 'smem constant byte address 0x4 - core index']
  #allocation1 [shape = 'u32[72,128]{1,0:T(1,128)}', space=vmem, size = 0x9000, scoped, tag = 'internal scratch']
  %s0 = inlined_call_operand.hbm [shape: f32[2,16,32], index: 0, kind: input, shape index: {}]
  %s1 = inlined_call_operand.hbm [shape: f32[3,32,56], index: 1, kind: input, shape index: {}]
  %s2 = inlined_call_operand.vmem [shape: f32[1,56], index: 2, kind: input, shape index: {}]
  %s3 = inlined_call_operand.hbm [shape: f32[3,56,96], index: 3, kind: input, shape index: {}]
  %s4 = inlined_call_operand.vmem [shape: f32[1,96], index: 4, kind: input, shape index: {}]
  %s5 = inlined_call_operand.vmem [shape: f32[2,12,96], index: 5, kind: output, shape index: {}]
  %s6 = sld [smem:[#allocation0]]
  $region65: #{tpu_custom_call.1} parent=0
    _
  %s8 = ssub.s32 1, %s6
  %s9 = scalar_select 0, %s8, %s6
  $region1: #{tpu_custom_call.1} parent=0
    #allocation2 [shape = 'u8[16384]{0}', space=vmem, size = 0x4000, scoped, tag = 'input window, operand 0']
    #allocation3 [shape = 's32[2]{0}', space=sflag, size = 0x8, scoped, tag = 'scoped memory for tpu_custom_call.1']
    #allocation4 [shape = 'u8[49152]{0}', space=vmem, size = 0xc000, scoped, tag = 'input window, operand 1, single buffered']
    #allocation5 [shape = 's32[1]{0}', space=sflag, size = 0x4, scoped, tag = 'scoped memory for tpu_custom_call.1']
    #allocation6 [shape = 'u8[86016]{0}', space=vmem, size = 0x15000, scoped, tag = 'input window, operand 3, single buffered']
    %10 = vsyncpa [#allocation3], 0
    %s11 = scalar_lea.sflag [#allocation3], 1
    %12 = vsyncpa %s11, 0
    %13 = vsyncpa [#allocation5], 0
    loop: start=0, step=1, limit=4
    $region2: #{tpu_custom_call.1} parent=1 // loop_pre_header
      _
    $region3: #{tpu_custom_call.1} parent=1 // loop_header
      %s15 = sphi 0, %s19
      %p16 = scmp.ge.s32.totalorder %s15, 4
      %s25 = sphi 0, %s27
      %s28 = sphi 0, %s25
      %s29 = sphi 0, %s28
      %s45 = sphi 0, %s29
      %s49 = sphi 0, %s49
      %s51 = sphi 0, %s49
      %s52 = sphi 0, %s51
      %s66 = sphi 0, %s52
      %s70 = sphi 0, %s70
      %s72 = sphi 0, %s70
      %s73 = sphi 0, %s72
      %s87 = sphi 0, %s73
      %s91 = sphi 0, %s91
      %s93 = sphi 0, %s91
      %s94 = sphi 0, %s93
      %s108 = sphi 0, %s94
      %s112 = sphi 0, %s112
      %s114 = sphi 0, %s112
      %s115 = sphi 0, %s114
      %s129 = sphi 0, %s115
      %s135 = sphi 0, %s137
      %s138 = sphi 0, %s135
      %s139 = sphi 0, %s138
      %s155 = sphi 0, %s139
    $region4: #{tpu_custom_call.1} parent=1 // loop_header_branch
      %18 = sbr.rel (%p16) target = $region8
    $region5: #{tpu_custom_call.1} parent=1 // loop_body
      %s20 = ssub.s32 %s15, 1
      %s21 = ssub.s32 %s15, 2
      %s22 = sadd.s32 %s15, 1
      %s23 = ssub.s32 %s15, %s22
      %p24 = scmp.eq.s32.totalorder %s23, 0
      %s26 = sadd.s32 %s25, 1
      %s27 = scalar_select %p24, %s25, %s26
      %p30 = pneg %p24
      %p31 = scmp.eq.s32.totalorder %s15, 1
      %p32 = por %p30, %p31
      %p33 = scmp.ne.s32.totalorder %s25, %s28
      %p34 = scmp.eq.s32.totalorder %s15, 0
      %p35 = por %p33, %p34
      %p36 = scmp.ne.s32.totalorder %s25, %s28
      %p37 = scmp.eq.s32.totalorder %s20, 1
      %p38 = por %p36, %p37
      %p39 = scmp.ne.s32.totalorder %s28, %s29
      %p40 = scmp.eq.s32.totalorder %s20, 0
      %p41 = por %p39, %p40
      %p42 = scmp.ne.s32.totalorder %s28, %s29
      %p43 = scmp.eq.s32.totalorder %s21, 1
      %p44 = por %p42, %p43
      %p46 = scmp.ne.s32.totalorder %s29, %s45
      %p47 = scmp.eq.s32.totalorder %s21, 0
      %p48 = por %p46, %p47
      %s50 = sadd.s32 %s49, 1
      %p53 = scmp.eq.s32.totalorder %s15, 1
      %p54 = scmp.ne.s32.totalorder %s49, %s51
      %p55 = scmp.eq.s32.totalorder %s15, 0
      %p56 = por %p54, %p55
      %p57 = scmp.ne.s32.totalorder %s49, %s51
      %p58 = scmp.eq.s32.totalorder %s20, 1
      %p59 = por %p57, %p58
      %p60 = scmp.ne.s32.totalorder %s51, %s52
      %p61 = scmp.eq.s32.totalorder %s20, 0
      %p62 = por %p60, %p61
      %p63 = scmp.ne.s32.totalorder %s51, %s52
      %p64 = scmp.eq.s32.totalorder %s21, 1
      %p65 = por %p63, %p64
      %p67 = scmp.ne.s32.totalorder %s52, %s66
      %p68 = scmp.eq.s32.totalorder %s21, 0
      %p69 = por %p67, %p68
      %s71 = sadd.s32 %s70, 1
      %p74 = scmp.eq.s32.totalorder %s15, 1
      %p75 = scmp.ne.s32.totalorder %s70, %s72
      %p76 = scmp.eq.s32.totalorder %s15, 0
      %p77 = por %p75, %p76
      %p78 = scmp.ne.s32.totalorder %s70, %s72
      %p79 = scmp.eq.s32.totalorder %s20, 1
      %p80 = por %p78, %p79
      %p81 = scmp.ne.s32.totalorder %s72, %s73
      %p82 = scmp.eq.s32.totalorder %s20, 0
      %p83 = por %p81, %p82
      %p84 = scmp.ne.s32.totalorder %s72, %s73
      %p85 = scmp.eq.s32.totalorder %s21, 1
      %p86 = por %p84, %p85
      %p88 = scmp.ne.s32.totalorder %s73, %s87
      %p89 = scmp.eq.s32.totalorder %s21, 0
      %p90 = por %p88, %p89
      %s92 = sadd.s32 %s91, 1
      %p95 = scmp.eq.s32.totalorder %s15, 1
      %p96 = scmp.ne.s32.totalorder %s91, %s93
      %p97 = scmp.eq.s32.totalorder %s15, 0
      %p98 = por %p96, %p97
      %p99 = scmp.ne.s32.totalorder %s91, %s93
      %p100 = scmp.eq.s32.totalorder %s20, 1
      %p101 = por %p99, %p100
      %p102 = scmp.ne.s32.totalorder %s93, %s94
      %p103 = scmp.eq.s32.totalorder %s20, 0
      %p104 = por %p102, %p103
      %p105 = scmp.ne.s32.totalorder %s93, %s94
      %p106 = scmp.eq.s32.totalorder %s21, 1
      %p107 = por %p105, %p106
      %p109 = scmp.ne.s32.totalorder %s94, %s108
      %p110 = scmp.eq.s32.totalorder %s21, 0
      %p111 = por %p109, %p110
      %s113 = sadd.s32 %s112, 1
      %p116 = scmp.eq.s32.totalorder %s15, 1
      %p117 = scmp.ne.s32.totalorder %s112, %s114
      %p118 = scmp.eq.s32.totalorder %s15, 0
      %p119 = por %p117, %p118
      %p120 = scmp.ne.s32.totalorder %s112, %s114
      %p121 = scmp.eq.s32.totalorder %s20, 1
      %p122 = por %p120, %p121
      %p123 = scmp.ne.s32.totalorder %s114, %s115
      %p124 = scmp.eq.s32.totalorder %s20, 0
      %p125 = por %p123, %p124
      %p126 = scmp.ne.s32.totalorder %s114, %s115
      %p127 = scmp.eq.s32.totalorder %s21, 1
      %p128 = por %p126, %p127
      %p130 = scmp.ne.s32.totalorder %s115, %s129
      %p131 = scmp.eq.s32.totalorder %s21, 0
      %p132 = por %p130, %p131
      %s133 = ssub.s32 %s15, %s22
      %p134 = scmp.eq.s32.totalorder %s133, 0
      %s136 = sadd.s32 %s135, 1
      %s137 = scalar_select %p134, %s135, %s136
      %p140 = pneg %p134
      %p141 = scmp.eq.s32.totalorder %s15, 1
      %p142 = por %p140, %p141
      %p143 = scmp.ne.s32.totalorder %s135, %s138
      %p144 = scmp.eq.s32.totalorder %s15, 0
      %p145 = por %p143, %p144
      %p146 = scmp.ne.s32.totalorder %s135, %s138
      %p147 = scmp.eq.s32.totalorder %s20, 1
      %p148 = por %p146, %p147
      %p149 = scmp.ne.s32.totalorder %s138, %s139
      %p150 = scmp.eq.s32.totalorder %s20, 0
      %p151 = por %p149, %p150
      %p152 = scmp.ne.s32.totalorder %s138, %s139
      %p153 = scmp.eq.s32.totalorder %s21, 1
      %p154 = por %p152, %p153
      %p156 = scmp.ne.s32.totalorder %s139, %s155
      %p157 = scmp.eq.s32.totalorder %s21, 0
      %p158 = por %p156, %p157
      %p159 = scmp.le.s32.totalorder 1, %s15
      %p160 = scmp.lt.s32.totalorder %s15, 3
      %p161 = pnand %p159, %p160
      %p162 = pneg %p161
      // Predicated region
      $region9: #{tpu_custom_call.1} parent=5 // pred_check
        _
      $region10: #{tpu_custom_call.1} parent=5 // pred_check_branch
        %164 = sbr.rel (%p161) target = $region12
      $region11: #{tpu_custom_call.1} parent=5 // pred_region
        %s165 = ssub.s32 %s15, 1
        // Predicated region
        $region13: #{tpu_custom_call.1} parent=11 // pred_check
          %p166 = pneg %p62
        $region14: #{tpu_custom_call.1} parent=11 // pred_check_branch
          %168 = sbr.rel (%p166) target = $region16
        $region15: #{tpu_custom_call.1} parent=11 // pred_region
          %170 = vsyncadd [#allocation5], 0
          %s171 = sshll.u32 %s1, 4
          %s172 = int_to_ptr.hbm [resolvable:$true] %s171
          %s173 = sshll.u32 [#allocation4], 4
          %s174 = int_to_ptr.vmem [resolvable:$true] %s173
          %179 = dma.hbm_to_vmem [thread:$0]  %s172, 1536, %s174, [#allocation5], 128, 128, 8
        $region16: #{tpu_custom_call.1} parent=11 // pred_fallthru
          _
        // Predicated region
        $region17: #{tpu_custom_call.1} parent=11 // pred_check
          %p180 = pneg %p83
        $region18: #{tpu_custom_call.1} parent=11 // pred_check_branch
          %182 = sbr.rel (%p180) target = $region20
        $region19: #{tpu_custom_call.1} parent=11 // pred_region
          _
        $region20: #{tpu_custom_call.1} parent=11 // pred_fallthru
          _
        // Predicated region
        $region21: #{tpu_custom_call.1} parent=11 // pred_check
          %p183 = pneg %p104
        $region22: #{tpu_custom_call.1} parent=11 // pred_check_branch
          %185 = sbr.rel (%p183) target = $region24
        $region23: #{tpu_custom_call.1} parent=11 // pred_region
          %187 = vsyncadd [#allocation5], 0
          %s188 = sshll.u32 %s3, 4
          %s189 = int_to_ptr.hbm [resolvable:$true] %s188
          %s190 = sshll.u32 [#allocation6], 4
          %s191 = int_to_ptr.vmem [resolvable:$true] %s190
          %196 = dma.hbm_to_vmem [thread:$0]  %s189, 2688, %s191, [#allocation5], 128, 128, 8
        $region24: #{tpu_custom_call.1} parent=11 // pred_fallthru
          _
        // Predicated region
        $region25: #{tpu_custom_call.1} parent=11 // pred_check
          %p197 = pneg %p125
        $region26: #{tpu_custom_call.1} parent=11 // pred_check_branch
          %199 = sbr.rel (%p197) target = $region28
        $region27: #{tpu_custom_call.1} parent=11 // pred_region
          _
        $region28: #{tpu_custom_call.1} parent=11 // pred_fallthru
          _
      $region12: #{tpu_custom_call.1} parent=5 // pred_fallthru
        _
      %p200 = scmp.lt.s32.totalorder %s15, 2
      // Predicated region
      $region29: #{tpu_custom_call.1} parent=5 // pred_check
        %p201 = pneg %p200
      $region30: #{tpu_custom_call.1} parent=5 // pred_check_branch
        %203 = sbr.rel (%p201) target = $region32
      $region31: #{tpu_custom_call.1} parent=5 // pred_region
        // Predicated region
        $region33: #{tpu_custom_call.1} parent=31 // pred_check
          %p204 = pneg %p35
        $region34: #{tpu_custom_call.1} parent=31 // pred_check_branch
          %206 = sbr.rel (%p204) target = $region36
        $region35: #{tpu_custom_call.1} parent=31 // pred_region
          %s207 = sand.u32 %s25, 1
          %s208 = scalar_lea.sflag [#allocation3], %s207
          %s209 = sand.u32 %s25, 1
          %s210 = smul.addr %s209, 16
          %s211 = scalar_lea.vmem [#allocation2], %s210
          %213 = vsyncadd %s208, 0
          %s214 = smul.addr %s15, 2
          %s215 = smul.addr %s214, 8
          %s216 = scalar_lea.hbm %s0, %s215
          %s217 = sshll.u32 %s216, 4
          %s218 = int_to_ptr.hbm [resolvable:$true] %s217
          %s219 = sshll.u32 %s211, 4
          %s220 = int_to_ptr.vmem [resolvable:$true] %s219
          %225 = dma.hbm_to_vmem [thread:$0]  %s218, 256, %s220, %s208, 128, 128, 8
        $region36: #{tpu_custom_call.1} parent=31 // pred_fallthru
          _
      $region32: #{tpu_custom_call.1} parent=5 // pred_fallthru
        _
      %p226 = scmp.le.s32.totalorder 1, %s15
      %p227 = scmp.lt.s32.totalorder %s15, 3
      %p228 = pnand %p226, %p227
      %p229 = pneg %p228
      // Predicated region
      $region37: #{tpu_custom_call.1} parent=5 // pred_check
        _
      $region38: #{tpu_custom_call.1} parent=5 // pred_check_branch
        %231 = sbr.rel (%p228) target = $region40
      $region39: #{tpu_custom_call.1} parent=5 // pred_region
        %s232 = ssub.s32 %s15, 1
        %s233 = sand.u32 %s28, 1
        %s234 = scalar_lea.sflag [#allocation3], %s233
        %s235 = sand.u32 %s28, 1
        %s236 = smul.addr %s235, 16
        %s237 = scalar_lea.vmem [#allocation2], %s236
        // Predicated region
        $region41: #{tpu_custom_call.1} parent=39 // pred_check
          %p238 = pneg %p41
        $region42: #{tpu_custom_call.1} parent=39 // pred_check_branch
          %240 = sbr.rel (%p238) target = $region44
        $region43: #{tpu_custom_call.1} parent=39 // pred_region
          %242 = dma.done %s234, 256
        $region44: #{tpu_custom_call.1} parent=39 // pred_fallthru
          _
        // Predicated region
        $region45: #{tpu_custom_call.1} parent=39 // pred_check
          %p243 = pneg %p62
        $region46: #{tpu_custom_call.1} parent=39 // pred_check_branch
          %245 = sbr.rel (%p243) target = $region48
        $region47: #{tpu_custom_call.1} parent=39 // pred_region
          %247 = dma.done [#allocation5], 1536
        $region48: #{tpu_custom_call.1} parent=39 // pred_fallthru
          _
        // Predicated region
        $region49: #{tpu_custom_call.1} parent=39 // pred_check
          %p248 = pneg %p104
        $region50: #{tpu_custom_call.1} parent=39 // pred_check_branch
          %250 = sbr.rel (%p248) target = $region52
        $region51: #{tpu_custom_call.1} parent=39 // pred_region
          %252 = dma.done [#allocation5], 2688
        $region52: #{tpu_custom_call.1} parent=39 // pred_fallthru
          _
        %s253 = sand.u32 %s28, 1
        %s254 = scalar_lea.sflag [#allocation3], %s253
        %s255 = sand.u32 %s28, 1
        %s256 = smul.addr %s255, 16
        %s257 = scalar_lea.vmem [#allocation2], %s256
        %p258 = pneg %p41
        %p259 = pneg %p38
        %p260 = pneg %p62
        %p261 = pneg %p59
        %p262 = pneg %p83
        %p263 = pneg %p80
        %p264 = pneg %p104
        %p265 = pneg %p101
        %p266 = pneg %p125
        %p267 = pneg %p122
        %p268 = pneg %p151
        %p269 = pneg %p148
        %p270 = scmp.lt.s32.totalorder %s20, 1
        %s271 = scalar_select %p270, %s20, 1
        %s272 = smul.addr %s271, 2
        %s273 = smul.addr %s272, 8
        %s274 = scalar_lea.vmem %s5, %s273
        %p275 = scmp.lt.s32.totalorder %s20, 1
        %s276 = scalar_select %p275, %s20, 1
        %s277 = smul.addr %s276, 2
        %s278 = smul.addr %s277, 8
        %s279 = scalar_lea.vmem %s5, %s278
        %v280 = vld [vmem:[%s237] sm:$0xff]
        %v281 = vld [vmem:[%s237 + $0x8] sm:$0xff]
        %v282 = vld [vmem:[#allocation4] sm:$0xff]
        %v283 = vld [vmem:[#allocation4 + $0x8] sm:$0xff]
        %v284 = vld [vmem:[#allocation4 + $0x10] sm:$0xff]
        %v285 = vld [vmem:[#allocation4 + $0x18] sm:$0xff]
        %s286 = scalar_lea.vmem [#allocation4], 32
        %v287 = vld [vmem:[%s286] sm:$0xff]
        %v288 = vld [vmem:[%s286 + $0x8] sm:$0xff]
        %v289 = vld [vmem:[%s286 + $0x10] sm:$0xff]
        %v290 = vld [vmem:[%s286 + $0x18] sm:$0xff]
        %vm293 = vcmask 1046528
        %v294 = vrot.slane %v280, 1
        %v295 = vrot.slane %v281, 1
        %v296 = vsel %vm293, %v294, %v295
        %vm297 = vcmask 261120
        %v298 = vsel %vm297, %v296, 0
        %v300 = vsel %vm297, %v295, 0
        %302 = vmatpush.msra.mxu0 0.0
        %303 = vmatpush.msra.mxu0 0.0
        %304 = vmatpush.msra.mxu0 0.0
        %305 = vmatpush.msra.mxu0 0.0
        %306 = vmatpush.msra.mxu0 0.0
        %307 = vmatpush.msra.mxu0 0.0
        %308 = vmatpush.msra.mxu0 0.0
        %309 = vmatpush.msra.mxu0 0.0
        %310 = vmatpush.msra.mxu0 0.0
        %311 = vmatpush.msra.mxu0 0.0
        %312 = vmatpush.msra.mxu0 0.0
        %313 = vmatpush.msra.mxu0 0.0
        %314 = vmatpush.msra.mxu0 %v290
        %315 = vmatpush.msra.mxu0 %v289
        %316 = vmatpush.msra.mxu0 %v288
        %317 = vmatpush.msra.mxu0 %v287
        %318 = vmatmul.f32.gmra.mxu0 %v298
        %v319 = vpop.f32.mrf.mxu0
        %v320 = vadd.f32 0.0, %v319
        %321 = vmatmul.f32.gmra.mxu0 %v300
        %v322 = vpop.f32.mrf.mxu0
        %v323 = vadd.f32 0.0, %v322
        %324 = vdwg.mxu0
        %v325 = vsel %vm297, %v280, 0
        %v327 = vsel %vm297, %v281, 0
        %329 = vmatpush.msra.mxu0 0.0
        %330 = vmatpush.msra.mxu0 0.0
        %331 = vmatpush.msra.mxu0 0.0
        %332 = vmatpush.msra.mxu0 0.0
        %333 = vmatpush.msra.mxu0 0.0
        %334 = vmatpush.msra.mxu0 0.0
        %335 = vmatpush.msra.mxu0 0.0
        %336 = vmatpush.msra.mxu0 0.0
        %337 = vmatpush.msra.mxu0 0.0
        %338 = vmatpush.msra.mxu0 0.0
        %339 = vmatpush.msra.mxu0 0.0
        %340 = vmatpush.msra.mxu0 0.0
        %341 = vmatpush.msra.mxu0 %v285
        %342 = vmatpush.msra.mxu0 %v284
        %343 = vmatpush.msra.mxu0 %v283
        %344 = vmatpush.msra.mxu0 %v282
        %345 = vmatmul.f32.gmra.mxu0 %v325
        %v346 = vpop.f32.mrf.mxu0
        %v347 = vadd.f32 %v320, %v346
        %348 = vmatmul.f32.gmra.mxu0 %v327
        %v349 = vpop.f32.mrf.mxu0
        %v350 = vadd.f32 %v323, %v349
        %351 = vdwg.mxu0
        %s352 = scalar_lea.vmem [#allocation4], 64
        %v353 = vld [vmem:[%s352] sm:$0xff]
        %v354 = vld [vmem:[%s352 + $0x8] sm:$0xff]
        %v355 = vld [vmem:[%s352 + $0x10] sm:$0xff]
        %v356 = vld [vmem:[%s352 + $0x18] sm:$0xff]
        %vm357 = vcmask 1045504
        %v358 = vrot.slane %v280, 2
        %v359 = vrot.slane %v281, 2
        %v360 = vsel %vm357, %v358, %v359
        %v361 = vsel %vm297, %v360, 0
        %v363 = vsel %vm297, %v359, 0
        %365 = vmatpush.msra.mxu0 0.0
        %366 = vmatpush.msra.mxu0 0.0
        %367 = vmatpush.msra.mxu0 0.0
        %368 = vmatpush.msra.mxu0 0.0
        %369 = vmatpush.msra.mxu0 0.0
        %370 = vmatpush.msra.mxu0 0.0
        %371 = vmatpush.msra.mxu0 0.0
        %372 = vmatpush.msra.mxu0 0.0
        %373 = vmatpush.msra.mxu0 0.0
        %374 = vmatpush.msra.mxu0 0.0
        %375 = vmatpush.msra.mxu0 0.0
        %376 = vmatpush.msra.mxu0 0.0
        %377 = vmatpush.msra.mxu0 %v356
        %378 = vmatpush.msra.mxu0 %v355
        %379 = vmatpush.msra.mxu0 %v354
        %380 = vmatpush.msra.mxu0 %v353
        %381 = vmatmul.f32.gmra.mxu0 %v361
        %v382 = vpop.f32.mrf.mxu0
        %v383 = vadd.f32 0.0, %v382
        %384 = vmatmul.f32.gmra.mxu0 %v363
        %v385 = vpop.f32.mrf.mxu0
        %v386 = vadd.f32 0.0, %v385
        %387 = vdwg.mxu0
        %v388 = vadd.f32 %v347, %v383
        %v389 = vadd.f32 %v350, %v386
        %v390 = vld [vmem:[%s2] sm:$0x1]
        %v392 = vperm.slane %v390, 0
        %v394 = vadd.f32 %v388, %v392
        %v395 = vadd.f32 %v389, %v392
        %v396 = vmax.f32 %v394, 0.0
        %v397 = vmax.f32 %v395, 0.0
        %v398 = vld [vmem:[#allocation6] sm:$0xff]
        %v399 = vld [vmem:[#allocation6 + $0x8] sm:$0xff]
        %v400 = vld [vmem:[#allocation6 + $0x10] sm:$0xff]
        %v401 = vld [vmem:[#allocation6 + $0x18] sm:$0xff]
        %v402 = vld [vmem:[#allocation6 + $0x20] sm:$0xff]
        %v403 = vld [vmem:[#allocation6 + $0x28] sm:$0xff]
        %v404 = vld [vmem:[#allocation6 + $0x30] sm:$0xff]
        %s405 = scalar_lea.vmem [#allocation6], 56
        %v406 = vld [vmem:[%s405] sm:$0xff]
        %v407 = vld [vmem:[%s405 + $0x8] sm:$0xff]
        %v408 = vld [vmem:[%s405 + $0x10] sm:$0xff]
        %v409 = vld [vmem:[%s405 + $0x18] sm:$0xff]
        %v410 = vld [vmem:[%s405 + $0x20] sm:$0xff]
        %v411 = vld [vmem:[%s405 + $0x28] sm:$0xff]
        %v412 = vld [vmem:[%s405 + $0x30] sm:$0xff]
        %v415 = vrot.slane %v396, 1
        %v416 = vrot.slane %v397, 1
        %v417 = vsel %vm293, %v415, %v416
        %vm418 = vcmask 457728
        %v419 = vsel %vm418, %v417, 0
        %v421 = vsel %vm418, %v416, 0
        %423 = vmatpush.msra.mxu0 0.0
        %424 = vmatpush.msra.mxu0 0.0
        %425 = vmatpush.msra.mxu0 0.0
        %426 = vmatpush.msra.mxu0 0.0
        %427 = vmatpush.msra.mxu0 0.0
        %428 = vmatpush.msra.mxu0 0.0
        %429 = vmatpush.msra.mxu0 0.0
        %430 = vmatpush.msra.mxu0 0.0
        %431 = vmatpush.msra.mxu0 0.0
        %432 = vmatpush.msra.mxu0 %v412
        %433 = vmatpush.msra.mxu0 %v411
        %434 = vmatpush.msra.mxu0 %v410
        %435 = vmatpush.msra.mxu0 %v409
        %436 = vmatpush.msra.mxu0 %v408
        %437 = vmatpush.msra.mxu0 %v407
        %438 = vmatpush.msra.mxu0 %v406
        %439 = vmatmul.f32.gmra.mxu0 %v419
        %v440 = vpop.f32.mrf.mxu0
        %v441 = vadd.f32 0.0, %v440
        %442 = vmatmul.f32.gmra.mxu0 %v421
        %v443 = vpop.f32.mrf.mxu0
        %v444 = vadd.f32 0.0, %v443
        %445 = vdwg.mxu0
        %v446 = vsel %vm418, %v396, 0
        %v448 = vsel %vm418, %v397, 0
        %450 = vmatpush.msra.mxu0 0.0
        %451 = vmatpush.msra.mxu0 0.0
        %452 = vmatpush.msra.mxu0 0.0
        %453 = vmatpush.msra.mxu0 0.0
        %454 = vmatpush.msra.mxu0 0.0
        %455 = vmatpush.msra.mxu0 0.0
        %456 = vmatpush.msra.mxu0 0.0
        %457 = vmatpush.msra.mxu0 0.0
        %458 = vmatpush.msra.mxu0 0.0
        %459 = vmatpush.msra.mxu0 %v404
        %460 = vmatpush.msra.mxu0 %v403
        %461 = vmatpush.msra.mxu0 %v402
        %462 = vmatpush.msra.mxu0 %v401
        %463 = vmatpush.msra.mxu0 %v400
        %464 = vmatpush.msra.mxu0 %v399
        %465 = vmatpush.msra.mxu0 %v398
        %466 = vmatmul.f32.gmra.mxu0 %v446
        %v467 = vpop.f32.mrf.mxu0
        %v468 = vadd.f32 %v441, %v467
        %469 = vmatmul.f32.gmra.mxu0 %v448
        %v470 = vpop.f32.mrf.mxu0
        %v471 = vadd.f32 %v444, %v470
        %472 = vdwg.mxu0
        %s473 = scalar_lea.vmem [#allocation6], 112
        %v474 = vld [vmem:[%s473] sm:$0xff]
        %v475 = vld [vmem:[%s473 + $0x8] sm:$0xff]
        %v476 = vld [vmem:[%s473 + $0x10] sm:$0xff]
        %v477 = vld [vmem:[%s473 + $0x18] sm:$0xff]
        %v478 = vld [vmem:[%s473 + $0x20] sm:$0xff]
        %v479 = vld [vmem:[%s473 + $0x28] sm:$0xff]
        %v480 = vld [vmem:[%s473 + $0x30] sm:$0xff]
        %v481 = vrot.slane %v396, 2
        %v482 = vrot.slane %v397, 2
        %v483 = vsel %vm357, %v481, %v482
        %v484 = vsel %vm418, %v483, 0
        %v486 = vsel %vm418, %v482, 0
        %488 = vmatpush.msra.mxu0 0.0
        %489 = vmatpush.msra.mxu0 0.0
        %490 = vmatpush.msra.mxu0 0.0
        %491 = vmatpush.msra.mxu0 0.0
        %492 = vmatpush.msra.mxu0 0.0
        %493 = vmatpush.msra.mxu0 0.0
        %494 = vmatpush.msra.mxu0 0.0
        %495 = vmatpush.msra.mxu0 0.0
        %496 = vmatpush.msra.mxu0 0.0
        %497 = vmatpush.msra.mxu0 %v480
        %498 = vmatpush.msra.mxu0 %v479
        %499 = vmatpush.msra.mxu0 %v478
        %500 = vmatpush.msra.mxu0 %v477
        %501 = vmatpush.msra.mxu0 %v476
        %502 = vmatpush.msra.mxu0 %v475
        %503 = vmatpush.msra.mxu0 %v474
        %504 = vmatmul.f32.gmra.mxu0 %v484
        %v505 = vpop.f32.mrf.mxu0
        %v506 = vadd.f32 0.0, %v505
        %507 = vmatmul.f32.gmra.mxu0 %v486
        %v508 = vpop.f32.mrf.mxu0
        %v509 = vadd.f32 0.0, %v508
        %510 = vdwg.mxu0
        %v511 = vadd.f32 %v468, %v506
        %v512 = vadd.f32 %v471, %v509
        %v513 = vld [vmem:[%s4] sm:$0x1]
        %v515 = vperm.slane %v513, 0
        %v517 = vadd.f32 %v511, %v515
        %v518 = vadd.f32 %v512, %v515
        %v519 = vmax.f32 %v517, 0.0
        %v520 = vmax.f32 %v518, 0.0
        %vm521 = vcmask 785408
        %522 = vst.msk [vmem:[%s279] sm:$0xff] %vm521, %v519
        %vm523 = vcmask 781312
        %524 = vst.msk [vmem:[%s279 + $0x8] sm:$0xf] %vm523, %v520
        %p525 = scmp.lt.s32.totalorder %s20, 1
        %s526 = scalar_select %p525, %s20, 1
        %s527 = smul.addr %s526, 2
        %s528 = smul.addr %s527, 8
        %s529 = scalar_lea.vmem %s5, %s528
        // Predicated region
        $region53: #{tpu_custom_call.1} parent=39 // pred_check
          %p530 = pneg %p148
        $region54: #{tpu_custom_call.1} parent=39 // pred_check_branch
          %532 = sbr.rel (%p530) target = $region56
        $region55: #{tpu_custom_call.1} parent=39 // pred_region
          _
        $region56: #{tpu_custom_call.1} parent=39 // pred_fallthru
          _
      $region40: #{tpu_custom_call.1} parent=5 // pred_fallthru
        _
      %p533 = scmp.le.s32.totalorder 2, %s15
      // Predicated region
      $region57: #{tpu_custom_call.1} parent=5 // pred_check
        %p534 = pneg %p533
      $region58: #{tpu_custom_call.1} parent=5 // pred_check_branch
        %536 = sbr.rel (%p534) target = $region60
      $region59: #{tpu_custom_call.1} parent=5 // pred_region
        %s537 = ssub.s32 %s15, 2
        // Predicated region
        $region61: #{tpu_custom_call.1} parent=59 // pred_check
          %p538 = pneg %p154
        $region62: #{tpu_custom_call.1} parent=59 // pred_check_branch
          %540 = sbr.rel (%p538) target = $region64
        $region63: #{tpu_custom_call.1} parent=59 // pred_region
          %p541 = scmp.lt.s32.totalorder %s21, 1
          %s542 = scalar_select %p541, %s21, 1
          %s543 = smul.addr %s542, 2
          %s544 = smul.addr %s543, 8
          %s545 = scalar_lea.vmem %s5, %s544
        $region64: #{tpu_custom_call.1} parent=59 // pred_fallthru
          _
      $region60: #{tpu_custom_call.1} parent=5 // pred_fallthru
        _
    $region6: #{tpu_custom_call.1} parent=1 // loop_footer
      %s19 = sadd.s32 1, %s15
    $region7: #{tpu_custom_call.1} parent=1 // loop_footer_branch
      %14 = sbr.rel target = $region3
    $region8: #{tpu_custom_call.1} parent=1 // loop_exit
      _
    %546 = vsyncpa [#allocation3], 1
    %s547 = scalar_lea.sflag [#allocation3], 1
    %548 = vsyncpa %s547, 1
    %549 = vsyncpa [#allocation5], 1

</llo_original>
